<compile_context>
chip_gen: v6e
topology: v6e:2x2x1
jax: 0.10.0
libtpu: 0.0.40
codegen_flags: <defaults>
</compile_context>

<pallas_src>
import jax
import jax.numpy as jnp
from jax import lax
from jax.experimental import pallas as pl
from jax.experimental.pallas import tpu as pltpu


def rewardnet_kernel(demo_ref, state_ref, w1d_ref, w1s_ref, b1_ref, w2t_ref,
                     b2_ref, o_ref):
    """One batch tile of the RewardNet forward pass.

    demo_ref : (TILE_B, D_demo)   bf16 (streamed)
    state_ref: (TILE_B, D_state)  bf16 (streamed)
    w1d_ref  : (D_demo, H)  bf16  (VMEM-resident)
    w1s_ref  : (D_state, H) bf16  (VMEM-resident)
    b1_ref   : (1, H)  f32        (VMEM-resident)
    w2t_ref  : (1, H)  f32        (VMEM-resident; torch linear2.weight layout)
    b2_ref   : (1, 1)  f32        (SMEM scalar)
    o_ref    : (1, TILE_B) f32    (lane-dense output slab)
    """
    # linear1 without concat: two MXU matmuls into one f32 accumulator.
    h = jnp.dot(demo_ref[...], w1d_ref[...], preferred_element_type=jnp.float32)
    h = h + jnp.dot(state_ref[...], w1s_ref[...],
                    preferred_element_type=jnp.float32)
    h = h + b1_ref[...]                      # (1, H) broadcast over rows, f32

    # LeakyReLU, PyTorch default negative_slope = 0.01 (f32 on the VPU).
    h = jnp.where(h > 0, h, 0.01 * h)

    # linear2, lane-dense: (1, H) x (TILE_B, H) contracting on H -> (1, TILE_B).
    out = lax.dot_general(w2t_ref[...], h, (((1,), (1,)), ((), ())),
                          preferred_element_type=jnp.float32)
    o_ref[...] = out + b2_ref[0, 0]          # scalar bias from SMEM


def _pick_tile_b(batch):
    """Largest convenient batch tile; lane-dense (multiple of 128) when tiled."""
    if batch <= 1024:
        return batch                      # single block == full dim (always legal)
    for t in (2048, 1024, 512, 256, 128):
        if batch % t == 0:
            return t
    return batch                          # fallback: whole batch in one block


def reward_net_forward(demo, state, w1_demo, w1_state, b1, w2, b2,
                       *, compute_dtype=jnp.bfloat16, tile_b=None):
    """Pallas forward; returns the torch-equivalent `.squeeze()`d result."""
    batch, d_demo = demo.shape
    _, d_state = state.shape
    hidden = w1_demo.shape[1]

    if tile_b is None:
        tile_b = _pick_tile_b(batch)
    grid = (pl.cdiv(batch, tile_b),)

    demo_c = demo.astype(compute_dtype)
    state_c = state.astype(compute_dtype)
    w1d_c = w1_demo.astype(compute_dtype)
    w1s_c = w1_state.astype(compute_dtype)
    b1_2d = b1.reshape(1, hidden).astype(jnp.float32)
    w2t = w2.reshape(1, hidden).astype(jnp.float32)
    b2_2d = b2.reshape(1, 1).astype(jnp.float32)

    out = pl.pallas_call(
        rewardnet_kernel,
        out_shape=jax.ShapeDtypeStruct((1, batch), jnp.float32),
        grid=grid,
        in_specs=[
            # streamed, double-buffered activation tiles
            pl.BlockSpec((tile_b, d_demo), lambda i: (i, 0)),
            pl.BlockSpec((tile_b, d_state), lambda i: (i, 0)),
            # weights/biases: full blocks, constant index_map -> VMEM-resident
            pl.BlockSpec((d_demo, hidden), lambda i: (0, 0)),
            pl.BlockSpec((d_state, hidden), lambda i: (0, 0)),
            pl.BlockSpec((1, hidden), lambda i: (0, 0)),
            pl.BlockSpec((1, hidden), lambda i: (0, 0)),
            # scalar bias lives in SMEM (no padded VMEM tile / DMA)
            pl.BlockSpec(memory_space=pltpu.MemorySpace.SMEM),
        ],
        out_specs=pl.BlockSpec((1, tile_b), lambda i: (0, i)),
        compiler_params=pltpu.CompilerParams(
            dimension_semantics=("parallel",)),
    )(demo_c, state_c, w1d_c, w1s_c, b1_2d, w2t, b2_2d)

    # torch `.squeeze()` removes all size-1 dims: (1, B) -> (B,) (or () if B == 1).
    return jnp.squeeze(out)


def reference_forward(demo, state, w1_demo, w1_state, b1, w2, b2,
                      compute_dtype=jnp.bfloat16):
    """Plain-JAX reference with the same bf16-input / f32-accumulate recipe."""
    h = (jnp.dot(demo.astype(compute_dtype), w1_demo.astype(compute_dtype),
                 preferred_element_type=jnp.float32)
         + jnp.dot(state.astype(compute_dtype), w1_state.astype(compute_dtype),
                   preferred_element_type=jnp.float32)
         + b1)
    h = jnp.where(h > 0, h, 0.01 * h)
    out = h @ w2.reshape(1, -1).T + b2            # (B, 1)
    return jnp.squeeze(out)


def init_params(key, demonstration_rep_dim, state_rep_dim, hidden_size):
    """nn.Linear-style uniform(-1/sqrt(fan_in), 1/sqrt(fan_in)); W1 pre-split."""
    combined_dim = demonstration_rep_dim + state_rep_dim
    k1, k2, k3, k4 = jax.random.split(key, 4)

    bound1 = 1.0 / (combined_dim ** 0.5)
    w1 = jax.random.uniform(k1, (combined_dim, hidden_size), jnp.float32,
                            -bound1, bound1)          # stored (in, out)
    w1_demo = w1[:demonstration_rep_dim]
    w1_state = w1[demonstration_rep_dim:]
    b1 = jax.random.uniform(k2, (hidden_size,), jnp.float32, -bound1, bound1)

    bound2 = 1.0 / (hidden_size ** 0.5)
    w2 = jax.random.uniform(k3, (1, hidden_size), jnp.float32, -bound2, bound2)
    b2 = jax.random.uniform(k4, (1,), jnp.float32, -bound2, bound2)
    return w1_demo, w1_state, b1, w2, b2


if __name__ == "__main__":
    batch = 8
    demonstration_rep_dim = 16
    state_rep_dim = 16
    hidden_size = 32

    key = jax.random.PRNGKey(0)
    k_demo, k_state, k_params = jax.random.split(key, 3)

    demo = jax.random.normal(k_demo, (batch, demonstration_rep_dim), jnp.float32)
    state = jax.random.normal(k_state, (batch, state_rep_dim), jnp.float32)
    params = init_params(k_params, demonstration_rep_dim, state_rep_dim,
                         hidden_size)

    # Small-shape run (single grid step; blocks equal full dims).
    out = jax.block_until_ready(reward_net_forward(demo, state, *params))
    ref = reference_forward(demo, state, *params)
    assert out.shape == (batch,), out.shape
    assert jnp.allclose(out, ref, atol=1e-3, rtol=1e-3), (out, ref)

    # Larger batch to exercise the pipelined multi-step grid / parallel axis.
    big_b = 4096
    kd2, ks2 = jax.random.split(jax.random.PRNGKey(1))
    demo2 = jax.random.normal(kd2, (big_b, demonstration_rep_dim), jnp.float32)
    state2 = jax.random.normal(ks2, (big_b, state_rep_dim), jnp.float32)
    out2 = jax.block_until_ready(reward_net_forward(demo2, state2, *params))
    ref2 = reference_forward(demo2, state2, *params)
    assert out2.shape == (big_b,), out2.shape
    assert jnp.allclose(out2, ref2, atol=1e-3, rtol=1e-3)

    print("KERNEL_OK")
</pallas_src>

<mosaic_0001>
module attributes {stable_mosaic.version = 11 : i64} {
  func.func @rewardnet_kernel(%arg0: i32, %arg1: memref<8x16xbf16, #tpu.memory_space<vmem>>, %arg2: memref<8x16xbf16, #tpu.memory_space<vmem>>, %arg3: memref<16x32xbf16, #tpu.memory_space<vmem>>, %arg4: memref<16x32xbf16, #tpu.memory_space<vmem>>, %arg5: memref<1x32xf32, #tpu.memory_space<vmem>>, %arg6: memref<1x32xf32, #tpu.memory_space<vmem>>, %arg7: memref<1x1xf32, #tpu.memory_space<smem>>, %arg8: memref<1x8xf32, #tpu.memory_space<vmem>>) attributes {dimension_semantics = [#tpu.dimension_semantics<parallel>], iteration_bounds = array<i64: 1>, scalar_prefetch = 0 : i64, scratch_operands = 0 : i64, tpu.core_type = #tpu.core_type<tc>, window_params = [{transform_indices = @transform_0, window_bounds = array<i64: 8, 16>}, {transform_indices = @transform_1, window_bounds = array<i64: 8, 16>}, {pipeline_mode = #tpu.pipeline_mode<synchronous>, transform_indices = @transform_2, window_bounds = array<i64: 16, 32>}, {pipeline_mode = #tpu.pipeline_mode<synchronous>, transform_indices = @transform_3, window_bounds = array<i64: 16, 32>}, {pipeline_mode = #tpu.pipeline_mode<synchronous>, transform_indices = @transform_4, window_bounds = array<i64: 1, 32>}, {pipeline_mode = #tpu.pipeline_mode<synchronous>, transform_indices = @transform_5, window_bounds = array<i64: 1, 32>}, {transform_indices = @transform_6, window_bounds = array<i64: 1, 1>}, {transform_indices = @transform_7, window_bounds = array<i64: 1, 8>}]} {
    %c0 = arith.constant 0 : index
    %c0_0 = arith.constant 0 : index
    %0 = vector.load %arg1[%c0, %c0_0] : memref<8x16xbf16, #tpu.memory_space<vmem>>, vector<8x16xbf16>
    %c0_1 = arith.constant 0 : index
    %c0_2 = arith.constant 0 : index
    %1 = vector.load %arg3[%c0_1, %c0_2] : memref<16x32xbf16, #tpu.memory_space<vmem>>, vector<16x32xbf16>
    %cst = arith.constant dense<0.000000e+00> : vector<8x32xf32>
    %2 = tpu.matmul %0, %1, %cst {dimension_numbers = #tpu.dot_dimension_numbers<[1], [0], [0], [1], [0, 0, 1, 1], [], []>} : vector<8x16xbf16>, vector<16x32xbf16>, vector<8x32xf32> -> vector<8x32xf32>
    %c0_3 = arith.constant 0 : index
    %c0_4 = arith.constant 0 : index
    %3 = vector.load %arg2[%c0_3, %c0_4] : memref<8x16xbf16, #tpu.memory_space<vmem>>, vector<8x16xbf16>
    %c0_5 = arith.constant 0 : index
    %c0_6 = arith.constant 0 : index
    %4 = vector.load %arg4[%c0_5, %c0_6] : memref<16x32xbf16, #tpu.memory_space<vmem>>, vector<16x32xbf16>
    %cst_7 = arith.constant dense<0.000000e+00> : vector<8x32xf32>
    %5 = tpu.matmul %3, %4, %cst_7 {dimension_numbers = #tpu.dot_dimension_numbers<[1], [0], [0], [1], [0, 0, 1, 1], [], []>} : vector<8x16xbf16>, vector<16x32xbf16>, vector<8x32xf32> -> vector<8x32xf32>
    %6 = arith.addf %2, %5 : vector<8x32xf32>
    %c0_8 = arith.constant 0 : index
    %c0_9 = arith.constant 0 : index
    %7 = vector.load %arg5[%c0_8, %c0_9] : memref<1x32xf32, #tpu.memory_space<vmem>>, vector<1x32xf32>
    %8 = vector.broadcast %7 : vector<1x32xf32> to vector<8x32xf32>
    %9 = arith.addf %6, %8 : vector<8x32xf32>
    %cst_10 = arith.constant 0.000000e+00 : f32
    %10 = vector.broadcast %cst_10 : f32 to vector<8x32xf32>
    %11 = arith.cmpf ogt, %9, %10 : vector<8x32xf32>
    %cst_11 = arith.constant 0.00999999977 : f32
    %12 = vector.broadcast %cst_11 : f32 to vector<8x32xf32>
    %13 = arith.mulf %12, %9 : vector<8x32xf32>
    %14 = arith.select %11, %9, %13 : vector<8x32xi1>, vector<8x32xf32>
    %c0_12 = arith.constant 0 : index
    %c0_13 = arith.constant 0 : index
    %15 = vector.load %arg6[%c0_12, %c0_13] : memref<1x32xf32, #tpu.memory_space<vmem>>, vector<1x32xf32>
    %cst_14 = arith.constant dense<0.000000e+00> : vector<1x8xf32>
    %16 = tpu.matmul %15, %14, %cst_14 {dimension_numbers = #tpu.dot_dimension_numbers<[1], [1], [0], [0], [0, 0, 1, 0], [], []>} : vector<1x32xf32>, vector<8x32xf32>, vector<1x8xf32> -> vector<1x8xf32>
    %c0_15 = arith.constant 0 : index
    %c0_16 = arith.constant 0 : index
    %17 = memref.load %arg7[%c0_15, %c0_16] : memref<1x1xf32, #tpu.memory_space<smem>>
    %18 = vector.broadcast %17 : f32 to vector<1x8xf32>
    %19 = arith.addf %16, %18 : vector<1x8xf32>
    %c0_17 = arith.constant 0 : index
    %c0_18 = arith.constant 0 : index
    %20 = vector.load %arg8[%c0_17, %c0_18] : memref<1x8xf32, #tpu.memory_space<vmem>>, vector<1x8xf32>
    tpu.vector_store %arg8[%c0_17, %c0_18], %19 {strides = array<i32>} : memref<1x8xf32, #tpu.memory_space<vmem>>, vector<1x8xf32>,
    return
  }
  func.func @transform_0(%arg0: i32) -> (i32, i32) {
    %c0_i32 = arith.constant 0 : i32
    %c0_i32_0 = arith.constant 0 : i32
    return %arg0, %c0_i32 : i32, i32
  }
  func.func @transform_1(%arg0: i32) -> (i32, i32) {
    %c0_i32 = arith.constant 0 : i32
    %c0_i32_0 = arith.constant 0 : i32
    return %arg0, %c0_i32 : i32, i32
  }
  func.func @transform_2(%arg0: i32) -> (i32, i32) {
    %c0_i32 = arith.constant 0 : i32
    %c0_i32_0 = arith.constant 0 : i32
    %c0_i32_1 = arith.constant 0 : i32
    return %c0_i32, %c0_i32_0 : i32, i32
  }
  func.func @transform_3(%arg0: i32) -> (i32, i32) {
    %c0_i32 = arith.constant 0 : i32
    %c0_i32_0 = arith.constant 0 : i32
    %c0_i32_1 = arith.constant 0 : i32
    return %c0_i32, %c0_i32_0 : i32, i32
  }
  func.func @transform_4(%arg0: i32) -> (i32, i32) {
    %c0_i32 = arith.constant 0 : i32
    %c0_i32_0 = arith.constant 0 : i32
    %c0_i32_1 = arith.constant 0 : i32
    return %c0_i32, %c0_i32_0 : i32, i32
  }
  func.func @transform_5(%arg0: i32) -> (i32, i32) {
    %c0_i32 = arith.constant 0 : i32
    %c0_i32_0 = arith.constant 0 : i32
    %c0_i32_1 = arith.constant 0 : i32
    return %c0_i32, %c0_i32_0 : i32, i32
  }
  func.func @transform_6(%arg0: i32) -> (i32, i32) {
    %c0_i32 = arith.constant 0 : i32
    %c0_i32_0 = arith.constant 0 : i32
    %c0_i32_1 = arith.constant 0 : i32
    return %c0_i32, %c0_i32_0 : i32, i32
  }
  func.func @transform_7(%arg0: i32) -> (i32, i32) {
    %c0_i32 = arith.constant 0 : i32
    %c0_i32_0 = arith.constant 0 : i32
    return %c0_i32, %arg0 : i32, i32
  }
}

</mosaic_0001>

<llo_original>
// kernel: tpu_custom_call.1
$region0: #{tpu_custom_call.1}
  #allocation0 [shape = 'u32[]', space=smem, size = 0x4, offset = 0x4, fixed_abs, tag = 'smem constant byte address 0x4 - core index']
  #allocation1 [shape = 'u32[144,128]{1,0:T(1,128)}', space=vmem, size = 0x12000, scoped, tag = 'internal scratch']
  #allocation2 [shape = 'f32[1,1]{1,0:T(1,128)S(6)}', space=smem, size = 0x200, scoped, tag = 'scoped memory for tpu_custom_call.1']
  %s0 = inlined_call_operand.hbm [shape: bf16[8,16], index: 0, kind: input, shape index: {}]
  %s1 = inlined_call_operand.hbm [shape: bf16[8,16], index: 1, kind: input, shape index: {}]
  %s2 = inlined_call_operand.hbm [shape: bf16[16,32], index: 2, kind: input, shape index: {}]
  %s3 = inlined_call_operand.hbm [shape: bf16[16,32], index: 3, kind: input, shape index: {}]
  %s4 = inlined_call_operand.vmem [shape: f32[1,32], index: 4, kind: input, shape index: {}]
  %s5 = inlined_call_operand.vmem [shape: f32[1,32], index: 5, kind: input, shape index: {}]
  %s6 = inlined_call_operand.<no memory space> [shape: f32[1,1], index: 6, kind: input, shape index: {}]
  %s7 = inlined_call_operand.hbm [shape: f32[1,8], index: 7, kind: output, shape index: {}]
  %s8 = sld [smem:[#allocation0]]
  $region54: #{tpu_custom_call.1} parent=0
    _
  %s10 = ssub.s32 1, %s8
  %s11 = scalar_select 0, %s10, %s8
  %12 = sst [smem:[#allocation2]] %s6
  $region1: #{tpu_custom_call.1} parent=0
    #allocation3 [shape = 'u8[2048]{0}', space=vmem, size = 0x800, scoped, tag = 'input window, operand 0, single buffered']
    #allocation4 [shape = 's32[1]{0}', space=sflag, size = 0x4, scoped, tag = 'scoped memory for tpu_custom_call.1']
    #allocation5 [shape = 's32[1]{0}', space=sflag, size = 0x4, scoped, tag = 'scoped memory for tpu_custom_call.1']
    #allocation6 [shape = 'u8[2048]{0}', space=vmem, size = 0x800, scoped, tag = 'input window, operand 1, single buffered']
    #allocation7 [shape = 's32[1]{0}', space=sflag, size = 0x4, scoped, tag = 'scoped memory for tpu_custom_call.1']
    #allocation8 [shape = 'u8[4096]{0}', space=vmem, size = 0x1000, scoped, tag = 'input window, operand 2, single buffered']
    #allocation9 [shape = 'u8[4096]{0}', space=vmem, size = 0x1000, scoped, tag = 'input window, operand 3, single buffered']
    #allocation10 [shape = 's32[1]{0}', space=sflag, size = 0x4, scoped, tag = 'scoped memory for tpu_custom_call.1']
    #allocation11 [shape = 'u8[512]{0}', space=vmem, size = 0x400, scoped, tag = 'output window, operand 0, single buffered']
    %13 = vsyncpa [#allocation4], 0
    %14 = vsyncpa [#allocation7], 0
    %15 = vsyncpa [#allocation10], 0
    %16 = vsyncpa [#allocation5], 0
    // Predicated region
    $region2: #{tpu_custom_call.1} parent=1 // pred_check
      _
    $region3: #{tpu_custom_call.1} parent=1 // pred_check_branch
      %18 = sbr.rel (0) target = $region5
    $region4: #{tpu_custom_call.1} parent=1 // pred_region
      %s20 = ssub.s32 64, 64
      %21 = vsyncadd [#allocation4], %s20
      %s23 = sshll.u32 [#allocation3], 4
      %s24 = int_to_ptr.vmem [resolvable:$true] %s23
      %26 = dma.hbm_to_vmem [thread:$0]  %s0, 64, %s24, [#allocation4]
    $region5: #{tpu_custom_call.1} parent=1 // pred_fallthru
      _
    // Predicated region
    $region6: #{tpu_custom_call.1} parent=1 // pred_check
      _
    $region7: #{tpu_custom_call.1} parent=1 // pred_check_branch
      %28 = sbr.rel (0) target = $region9
    $region8: #{tpu_custom_call.1} parent=1 // pred_region
      %s30 = ssub.s32 64, 64
      %31 = vsyncadd [#allocation7], %s30
      %s33 = sshll.u32 [#allocation6], 4
      %s34 = int_to_ptr.vmem [resolvable:$true] %s33
      %36 = dma.hbm_to_vmem [thread:$0]  %s1, 64, %s34, [#allocation7]
    $region9: #{tpu_custom_call.1} parent=1 // pred_fallthru
      _
    // Predicated region
    $region10: #{tpu_custom_call.1} parent=1 // pred_check
      _
    $region11: #{tpu_custom_call.1} parent=1 // pred_check_branch
      %38 = sbr.rel (0) target = $region13
    $region12: #{tpu_custom_call.1} parent=1 // pred_region
      %s40 = ssub.s32 128, 128
      %41 = vsyncadd [#allocation7], %s40
      %s42 = sshll.u32 [#allocation8], 4
      %s43 = int_to_ptr.vmem [resolvable:$true] %s42
      %48 = dma.hbm_to_vmem [thread:$0]  %s2, 128, %s43, [#allocation7], 64, 64, 4
    $region13: #{tpu_custom_call.1} parent=1 // pred_fallthru
      _
    // Predicated region
    $region14: #{tpu_custom_call.1} parent=1 // pred_check
      _
    $region15: #{tpu_custom_call.1} parent=1 // pred_check_branch
      %50 = sbr.rel (0) target = $region17
    $region16: #{tpu_custom_call.1} parent=1 // pred_region
      %s52 = ssub.s32 128, 128
      %53 = vsyncadd [#allocation10], %s52
      %s54 = sshll.u32 [#allocation9], 4
      %s55 = int_to_ptr.vmem [resolvable:$true] %s54
      %60 = dma.hbm_to_vmem [thread:$0]  %s3, 128, %s55, [#allocation10], 64, 64, 4
    $region17: #{tpu_custom_call.1} parent=1 // pred_fallthru
      _
    // Predicated region
    $region18: #{tpu_custom_call.1} parent=1 // pred_check
      _
    $region19: #{tpu_custom_call.1} parent=1 // pred_check_branch
      %62 = sbr.rel (0) target = $region21
    $region20: #{tpu_custom_call.1} parent=1 // pred_region
      _
    $region21: #{tpu_custom_call.1} parent=1 // pred_fallthru
      _
    // Predicated region
    $region22: #{tpu_custom_call.1} parent=1 // pred_check
      _
    $region23: #{tpu_custom_call.1} parent=1 // pred_check_branch
      %64 = sbr.rel (0) target = $region25
    $region24: #{tpu_custom_call.1} parent=1 // pred_region
      _
    $region25: #{tpu_custom_call.1} parent=1 // pred_fallthru
      _
    // Predicated region
    $region26: #{tpu_custom_call.1} parent=1 // pred_check
      _
    $region27: #{tpu_custom_call.1} parent=1 // pred_check_branch
      %66 = sbr.rel (0) target = $region29
    $region28: #{tpu_custom_call.1} parent=1 // pred_region
      _
    $region29: #{tpu_custom_call.1} parent=1 // pred_fallthru
      _
    // Predicated region
    $region30: #{tpu_custom_call.1} parent=1 // pred_check
      _
    $region31: #{tpu_custom_call.1} parent=1 // pred_check_branch
      %68 = sbr.rel (0) target = $region33
    $region32: #{tpu_custom_call.1} parent=1 // pred_region
      %69 = dma.done [#allocation4], 64
    $region33: #{tpu_custom_call.1} parent=1 // pred_fallthru
      _
    // Predicated region
    $region34: #{tpu_custom_call.1} parent=1 // pred_check
      _
    $region35: #{tpu_custom_call.1} parent=1 // pred_check_branch
      %71 = sbr.rel (0) target = $region37
    $region36: #{tpu_custom_call.1} parent=1 // pred_region
      %72 = dma.done [#allocation7], 64
    $region37: #{tpu_custom_call.1} parent=1 // pred_fallthru
      _
    // Predicated region
    $region38: #{tpu_custom_call.1} parent=1 // pred_check
      _
    $region39: #{tpu_custom_call.1} parent=1 // pred_check_branch
      %74 = sbr.rel (0) target = $region41
    $region40: #{tpu_custom_call.1} parent=1 // pred_region
      %75 = dma.done [#allocation7], 128
    $region41: #{tpu_custom_call.1} parent=1 // pred_fallthru
      _
    // Predicated region
    $region42: #{tpu_custom_call.1} parent=1 // pred_check
      _
    $region43: #{tpu_custom_call.1} parent=1 // pred_check_branch
      %77 = sbr.rel (0) target = $region45
    $region44: #{tpu_custom_call.1} parent=1 // pred_region
      %78 = dma.done [#allocation10], 128
    $region45: #{tpu_custom_call.1} parent=1 // pred_fallthru
      _
    %v80 = vld [vmem:[#allocation3] sm:$0xf]
    %v81 = vld [vmem:[#allocation8] sm:$0xf]
    %v82 = vld [vmem:[#allocation8 + $0x4] sm:$0xf]
    %v83 = vld [vmem:[#allocation6] sm:$0xf]
    %v84 = vld [vmem:[#allocation9] sm:$0xf]
    %v85 = vld [vmem:[#allocation9 + $0x4] sm:$0xf]
    %v88 = vunpack.c.l.b16 %v84
    %v89 = vunpack.c.l.b16 %v85
    %v90 = vpack.c.b16 %v89, %v88
    %vm92 = vcmask 130048
    %v94 = vsel %vm92, %v83, 0
    %96 = vmatprep.subr.bf16.mxu0 0
    %97 = vmatpush1.bf16.msra.mxu0 0
    %98 = vmatprep.subr.bf16.mxu0 0
    %99 = vmatpush1.bf16.msra.mxu0 0
    %100 = vmatprep.subr.bf16.mxu0 0
    %101 = vmatpush1.bf16.msra.mxu0 0
    %102 = vmatprep.subr.bf16.mxu0 0
    %103 = vmatpush1.bf16.msra.mxu0 0
    %104 = vmatprep.subr.bf16.mxu0 0
    %105 = vmatpush1.bf16.msra.mxu0 0
    %106 = vmatprep.subr.bf16.mxu0 0
    %107 = vmatpush1.bf16.msra.mxu0 0
    %108 = vmatprep.subr.bf16.mxu0 0
    %109 = vmatpush1.bf16.msra.mxu0 0
    %110 = vmatprep.subr.bf16.mxu0 0
    %111 = vmatpush1.bf16.msra.mxu0 %v90
    %112 = vmatprep.subr.bf16.mxu0 0
    %113 = vmatpush2.bf16.msra.mxu0 0
    %114 = vmatprep.subr.bf16.mxu0 0
    %115 = vmatpush2.bf16.msra.mxu0 0
    %116 = vmatprep.subr.bf16.mxu0 0
    %117 = vmatpush2.bf16.msra.mxu0 0
    %118 = vmatprep.subr.bf16.mxu0 0
    %119 = vmatpush2.bf16.msra.mxu0 0
    %120 = vmatprep.subr.bf16.mxu0 0
    %121 = vmatpush2.bf16.msra.mxu0 0
    %122 = vmatprep.subr.bf16.mxu0 0
    %123 = vmatpush2.bf16.msra.mxu0 0
    %124 = vmatprep.subr.bf16.mxu0 0
    %125 = vmatpush2.bf16.msra.mxu0 0
    %126 = vmatprep.subr.bf16.mxu0 0
    %127 = vmatpush2.bf16.msra.mxu0 0
    %128 = vmatprep.mubr.bf16.mxu0 0
    %129 = vmatmul.mubr.bf16.gmra.mxu0 %v94
    %v130 = vpop.f32.mrf.mxu0
    %v131 = vadd.f32 0.0, %v130
    %v132 = vpop.f32.mrf.mxu0
    %v133 = vpop.f32.mrf.mxu0
    %v134 = vpop.f32.mrf.mxu0
    %135 = vdwg.mxu0
    %v138 = vunpack.c.l.b16 %v81
    %v139 = vunpack.c.l.b16 %v82
    %v140 = vpack.c.b16 %v139, %v138
    %v143 = vsel %vm92, %v80, 0
    %145 = vmatprep.subr.bf16.mxu0 0
    %146 = vmatpush1.bf16.msra.mxu0 0
    %147 = vmatprep.subr.bf16.mxu0 0
    %148 = vmatpush1.bf16.msra.mxu0 0
    %149 = vmatprep.subr.bf16.mxu0 0
    %150 = vmatpush1.bf16.msra.mxu0 0
    %151 = vmatprep.subr.bf16.mxu0 0
    %152 = vmatpush1.bf16.msra.mxu0 0
    %153 = vmatprep.subr.bf16.mxu0 0
    %154 = vmatpush1.bf16.msra.mxu0 0
    %155 = vmatprep.subr.bf16.mxu0 0
    %156 = vmatpush1.bf16.msra.mxu0 0
    %157 = vmatprep.subr.bf16.mxu0 0
    %158 = vmatpush1.bf16.msra.mxu0 0
    %159 = vmatprep.subr.bf16.mxu0 0
    %160 = vmatpush1.bf16.msra.mxu0 %v140
    %161 = vmatprep.subr.bf16.mxu0 0
    %162 = vmatpush2.bf16.msra.mxu0 0
    %163 = vmatprep.subr.bf16.mxu0 0
    %164 = vmatpush2.bf16.msra.mxu0 0
    %165 = vmatprep.subr.bf16.mxu0 0
    %166 = vmatpush2.bf16.msra.mxu0 0
    %167 = vmatprep.subr.bf16.mxu0 0
    %168 = vmatpush2.bf16.msra.mxu0 0
    %169 = vmatprep.subr.bf16.mxu0 0
    %170 = vmatpush2.bf16.msra.mxu0 0
    %171 = vmatprep.subr.bf16.mxu0 0
    %172 = vmatpush2.bf16.msra.mxu0 0
    %173 = vmatprep.subr.bf16.mxu0 0
    %174 = vmatpush2.bf16.msra.mxu0 0
    %175 = vmatprep.subr.bf16.mxu0 0
    %176 = vmatpush2.bf16.msra.mxu0 0
    %177 = vmatprep.mubr.bf16.mxu0 0
    %178 = vmatmul.mubr.bf16.gmra.mxu0 %v143
    %v179 = vpop.f32.mrf.mxu0
    %v180 = vadd.f32 %v131, %v179
    %v181 = vpop.f32.mrf.mxu0
    %v182 = vpop.f32.mrf.mxu0
    %v183 = vpop.f32.mrf.mxu0
    %184 = vdwg.mxu0
    %v185 = vld [vmem:[%s4] sm:$0x1]
    %v187 = vlaneseq
    %v188 = vshrl.u32 %v187, 7
    %v189 = vsub.s32 0, %v188
    %v190 = vrot.slane %v185, %v189
    %v192 = vadd.f32 %v180, %v190
    %vm193 = vcmp.gt.f32.partialorder %v192, 0.0
    %v194 = vmul.f32 %v192, 0.01
    %v195 = vsel %vm193, %v192, %v194
    %v196 = vld [vmem:[%s5] sm:$0x1]
    %s197 = sld [smem:[#allocation2]]
    %v198 = vstv %s197
    %vm199 = vcmask 261120
    %v201 = vsel %vm199, %v196, 0
    %v204 = vsel %vm199, %v195, 0
    %206 = vmatprep.subr.mxu0 0.0
    %207 = vmatpush1.xpose.msra.mxu0 0.0
    %208 = vmatprep.subr.mxu0 0.0
    %209 = vmatpush1.xpose.msra.mxu0 0.0
    %210 = vmatprep.subr.mxu0 0.0
    %211 = vmatpush1.xpose.msra.mxu0 0.0
    %212 = vmatprep.subr.mxu0 0.0
    %213 = vmatpush1.xpose.msra.mxu0 0.0
    %214 = vmatprep.subr.mxu0 0.0
    %215 = vmatpush1.xpose.msra.mxu0 0.0
    %216 = vmatprep.subr.mxu0 0.0
    %217 = vmatpush1.xpose.msra.mxu0 0.0
    %218 = vmatprep.subr.mxu0 0.0
    %219 = vmatpush1.xpose.msra.mxu0 0.0
    %220 = vmatprep.subr.mxu0 0.0
    %221 = vmatpush1.xpose.msra.mxu0 0.0
    %222 = vmatprep.subr.mxu0 0.0
    %223 = vmatpush1.xpose.msra.mxu0 0.0
    %224 = vmatprep.subr.mxu0 0.0
    %225 = vmatpush1.xpose.msra.mxu0 0.0
    %226 = vmatprep.subr.mxu0 0.0
    %227 = vmatpush1.xpose.msra.mxu0 0.0
    %228 = vmatprep.subr.mxu0 0.0
    %229 = vmatpush1.xpose.msra.mxu0 0.0
    %230 = vmatprep.subr.mxu0 0.0
    %231 = vmatpush1.xpose.msra.mxu0 0.0
    %232 = vmatprep.subr.mxu0 0.0
    %233 = vmatpush1.xpose.msra.mxu0 0.0
    %234 = vmatprep.subr.mxu0 0.0
    %235 = vmatpush1.xpose.msra.mxu0 0.0
    %236 = vmatprep.subr.mxu0 0.0
    %237 = vmatpush1.xpose.msra.mxu0 %v204
    %238 = vmatprep.subr.mxu0 0.0
    %239 = vmatpush2.xpose.msra.mxu0 0.0
    %240 = vmatprep.subr.mxu0 0.0
    %241 = vmatpush2.xpose.msra.mxu0 0.0
    %242 = vmatprep.subr.mxu0 0.0
    %243 = vmatpush2.xpose.msra.mxu0 0.0
    %244 = vmatprep.subr.mxu0 0.0
    %245 = vmatpush2.xpose.msra.mxu0 0.0
    %246 = vmatprep.subr.mxu0 0.0
    %247 = vmatpush2.xpose.msra.mxu0 0.0
    %248 = vmatprep.subr.mxu0 0.0
    %249 = vmatpush2.xpose.msra.mxu0 0.0
    %250 = vmatprep.subr.mxu0 0.0
    %251 = vmatpush2.xpose.msra.mxu0 0.0
    %252 = vmatprep.subr.mxu0 0.0
    %253 = vmatpush2.xpose.msra.mxu0 0.0
    %254 = vmatprep.subr.mxu0 0.0
    %255 = vmatpush2.xpose.msra.mxu0 0.0
    %256 = vmatprep.subr.mxu0 0.0
    %257 = vmatpush2.xpose.msra.mxu0 0.0
    %258 = vmatprep.subr.mxu0 0.0
    %259 = vmatpush2.xpose.msra.mxu0 0.0
    %260 = vmatprep.subr.mxu0 0.0
    %261 = vmatpush2.xpose.msra.mxu0 0.0
    %262 = vmatprep.subr.mxu0 0.0
    %263 = vmatpush2.xpose.msra.mxu0 0.0
    %264 = vmatprep.subr.mxu0 0.0
    %265 = vmatpush2.xpose.msra.mxu0 0.0
    %266 = vmatprep.subr.mxu0 0.0
    %267 = vmatpush2.xpose.msra.mxu0 0.0
    %268 = vmatprep.subr.mxu0 0.0
    %269 = vmatpush2.xpose.msra.mxu0 0.0
    %270 = vmatprep.mubr.f32.mxu0 0.0
    %271 = vmatmul.mubr.f32.gmra.mxu0 %v201
    %v272 = vpop.f32.mrf.mxu0
    %v273 = vadd.f32 %v198, %v272
    %v274 = vpop.f32.mrf.mxu0
    %275 = vdwg.mxu0
    %vm276 = vcmask 57344
    %277 = vst.msk [vmem:[#allocation11] sm:$0x1] %vm276, %v273
    // Predicated region
    $region46: #{tpu_custom_call.1} parent=1 // pred_check
      _
    $region47: #{tpu_custom_call.1} parent=1 // pred_check_branch
      %279 = sbr.rel (0) target = $region49
    $region48: #{tpu_custom_call.1} parent=1 // pred_region
      %s281 = ssub.s32 16, 16
      %282 = vsyncadd [#allocation5], %s281
      %s284 = sshll.u32 [#allocation11], 4
      %s285 = int_to_ptr.vmem [resolvable:$true] %s284
      %287 = dma.vmem_to_hbm [thread:$0]  %s285, 16, %s7, [#allocation5]
    $region49: #{tpu_custom_call.1} parent=1 // pred_fallthru
      _
    // Predicated region
    $region50: #{tpu_custom_call.1} parent=1 // pred_check
      _
    $region51: #{tpu_custom_call.1} parent=1 // pred_check_branch
      %289 = sbr.rel (0) target = $region53
    $region52: #{tpu_custom_call.1} parent=1 // pred_region
      %290 = dma.done [#allocation5], 16
    $region53: #{tpu_custom_call.1} parent=1 // pred_fallthru
      _
    %291 = vsyncpa [#allocation4], 1
    %292 = vsyncpa [#allocation7], 1
    %293 = vsyncpa [#allocation10], 1
    %294 = vsyncpa [#allocation5], 1

</llo_original>
